<compile_context>
chip_gen: v5e
topology: v5e:2x2
jax: 0.10.0
libtpu: 0.0.40
codegen_flags: <defaults>
</compile_context>

<pallas_src>
import functools
import numpy as np
import jax
import jax.numpy as jnp
from jax.experimental import pallas as pl
from jax.experimental.pallas import tpu as pltpu


# --------------------------------------------------------------------------------------
# Pallas kernels: im2col sparse conv (single matmul) + BN affine (+ residual) (+ ReLU)
# --------------------------------------------------------------------------------------
def _conv_bn_kernel(xg_ref, w_ref, scale_ref, shift_ref, out_ref, *, relu):
    y = jnp.dot(xg_ref[...], w_ref[...], preferred_element_type=jnp.float32)
    y = y * scale_ref[...] + shift_ref[...]
    if relu:
        y = jnp.maximum(y, 0.0)
    out_ref[...] = y.astype(out_ref.dtype)


def _conv_bn_res_kernel(xg_ref, w_ref, scale_ref, shift_ref, res_ref, out_ref, *,
                        relu, res_after_relu):
    y = jnp.dot(xg_ref[...], w_ref[...], preferred_element_type=jnp.float32)
    y = y * scale_ref[...] + shift_ref[...]
    if res_after_relu:
        if relu:
            y = jnp.maximum(y, 0.0)
        y = y + res_ref[...]
    else:
        y = y + res_ref[...]
        if relu:
            y = jnp.maximum(y, 0.0)
    out_ref[...] = y.astype(out_ref.dtype)


def _round_up(n, m):
    return ((n + m - 1) // m) * m


def sparse_conv_bn(feat_in, gather_idx, weight, scale, shift, residual=None,
                   relu=True, res_after_relu=False, tile_n_max=512):
    """Sparse convolution + folded BatchNorm (+ residual) (+ ReLU), im2col formulation.

    feat_in:    (N_in, C_in) float32
    gather_idx: (K, N_out) int32, index into feat_in per kernel offset, -1 = no pair
    weight:     (K, C_in, C_out) float32
    scale/shift:(C_out,) folded BN affine (eval mode)
    residual:   optional (N_out, C_out); added before ReLU unless res_after_relu.
    """
    K, N_out = gather_idx.shape
    N_in, C_in = feat_in.shape
    C_out = weight.shape[2]
    KC = K * C_in

    # Zero-row trick: append one guaranteed-zero row, remap -1 -> N_in. No masking pass needed.
    feat_ext = jnp.concatenate(
        [jnp.asarray(feat_in, jnp.float32), jnp.zeros((1, C_in), jnp.float32)],
        axis=0).astype(jnp.bfloat16)

    idx = jnp.asarray(gather_idx, jnp.int32)
    idx = jnp.where(idx < 0, N_in, idx).T                     # (N_out, K)

    tile_n = min(tile_n_max, _round_up(max(N_out, 1), 128))
    n_pad = _round_up(max(N_out, 1), tile_n)
    # Pad the (cheap, int32) index table instead of the gathered features: padded rows point at
    # the zero row, so the gather produces zero-padded rows directly.
    idx = jnp.pad(idx, ((0, n_pad - N_out), (0, 0)), constant_values=N_in)

    # im2col gather: (n_pad, K*C_in) bf16.
    xg = feat_ext[idx].reshape(n_pad, KC)

    w = jnp.asarray(weight, jnp.float32).reshape(KC, C_out).astype(jnp.bfloat16)
    scale2 = jnp.asarray(scale, jnp.float32).reshape(1, C_out)
    shift2 = jnp.asarray(shift, jnp.float32).reshape(1, C_out)

    in_specs = [
        pl.BlockSpec((tile_n, KC), lambda i: (i, 0)),
        pl.BlockSpec((KC, C_out), lambda i: (0, 0)),
        pl.BlockSpec((1, C_out), lambda i: (0, 0)),
        pl.BlockSpec((1, C_out), lambda i: (0, 0)),
    ]
    args = [xg, w, scale2, shift2]
    bytes_accessed = xg.size * 2 + w.size * 2 + n_pad * C_out * 4 + 2 * C_out * 4

    if residual is not None:
        res = jnp.pad(jnp.asarray(residual, jnp.float32), ((0, n_pad - N_out), (0, 0)))
        in_specs.append(pl.BlockSpec((tile_n, C_out), lambda i: (i, 0)))
        args.append(res)
        bytes_accessed += res.size * 4
        kernel = functools.partial(_conv_bn_res_kernel, relu=relu,
                                   res_after_relu=res_after_relu)
    else:
        kernel = functools.partial(_conv_bn_kernel, relu=relu)

    out = pl.pallas_call(
        kernel,
        out_shape=jax.ShapeDtypeStruct((n_pad, C_out), jnp.float32),
        grid_spec=pltpu.PrefetchScalarGridSpec(
            num_scalar_prefetch=0,
            grid=(n_pad // tile_n,),
            in_specs=in_specs,
            out_specs=pl.BlockSpec((tile_n, C_out), lambda i: (i, 0)),
        ),
        compiler_params=pltpu.CompilerParams(
            dimension_semantics=("parallel",),
            vmem_limit_bytes=32 * 1024 * 1024),
        cost_estimate=pl.CostEstimate(
            flops=2 * n_pad * KC * C_out,
            transcendentals=0,
            bytes_accessed=int(bytes_accessed)),
    )(*args)
    return out[:N_out]


# --------------------------------------------------------------------------------------
# Host-side (numpy) spconv rulebook construction — pure integer geometry, not the hot path
# --------------------------------------------------------------------------------------
def _dense_hash(coords, shape, batch_size):
    D, H, W = shape
    grid = -np.ones((batch_size, D, H, W), np.int64)
    grid[coords[:, 0], coords[:, 1], coords[:, 2], coords[:, 3]] = np.arange(coords.shape[0])
    return grid


def build_subm_rules(coords, shape, batch_size, ksize=(3, 3, 3)):
    """SubMConv3d: output coords == input coords; centered 3x3x3 neighborhood lookup."""
    # TODO(synk): spconv ignores the `padding` arg for submanifold convs; we do too (centered kernel).
    grid = _dense_hash(coords, shape, batch_size)
    N = coords.shape[0]
    offsets = [(kz, ky, kx) for kz in range(ksize[0]) for ky in range(ksize[1]) for kx in range(ksize[2])]
    K = len(offsets)
    gidx = np.full((K, N), -1, np.int32)
    shape_a = np.array(shape)
    for ki, (kz, ky, kx) in enumerate(offsets):
        d = np.array([kz - ksize[0] // 2, ky - ksize[1] // 2, kx - ksize[2] // 2])
        nb = coords[:, 1:4] + d
        ok = np.all((nb >= 0) & (nb < shape_a), axis=1)
        gidx[ki, ok] = grid[coords[ok, 0], nb[ok, 0], nb[ok, 1], nb[ok, 2]]
    return gidx


def build_spconv_rules(coords, shape, batch_size, ksize, stride, padding):
    """Regular SparseConv3d rulebook (and its inverse, for SparseInverseConv3d on the same key).

    Fully vectorized (no per-voxel Python loop).
    """
    ksize = np.array(ksize); stride = np.array(stride); padding = np.array(padding)
    shape_a = np.array(shape)
    out_shape = (shape_a + 2 * padding - ksize) // stride + 1
    grid_in = _dense_hash(coords, shape, batch_size)

    offsets = np.array([(kz, ky, kx) for kz in range(ksize[0])
                        for ky in range(ksize[1]) for kx in range(ksize[2])], np.int64)
    K = offsets.shape[0]
    N = coords.shape[0]

    cin = coords[:, 1:4].astype(np.int64)                                 # (N, 3)
    num = cin[None, :, :] + padding[None, None, :] - offsets[:, None, :]  # (K, N, 3)
    div_ok = np.all(num % stride[None, None, :] == 0, axis=2)
    o = num // stride[None, None, :]
    in_ok = np.all((o >= 0) & (o < out_shape[None, None, :]), axis=2)
    valid = div_ok & in_ok                                                # (K, N)
    b = np.broadcast_to(coords[None, :, 0].astype(np.int64), (K, N))
    lin = ((b * out_shape[0] + o[..., 0]) * out_shape[1] + o[..., 1]) * out_shape[2] + o[..., 2]
    lin_valid = np.unique(lin[valid])
    N_out = lin_valid.shape[0]

    out_coords = np.empty((N_out, 4), np.int32)
    rem = lin_valid
    out_coords[:, 3] = rem % out_shape[2]; rem = rem // out_shape[2]
    out_coords[:, 2] = rem % out_shape[1]; rem = rem // out_shape[1]
    out_coords[:, 1] = rem % out_shape[0]; rem = rem // out_shape[0]
    out_coords[:, 0] = rem

    gidx = np.full((K, N_out), -1, np.int32)   # forward: per output, which input feeds offset k
    ginv = np.full((K, N), -1, np.int32)       # inverse: per fine voxel, which coarse output feeds it
    for ki in range(K):
        c_in = out_coords[:, 1:4].astype(np.int64) * stride - padding + offsets[ki]
        ok = np.all((c_in >= 0) & (c_in < shape_a), axis=1)
        sel = np.where(ok)[0]
        vals = grid_in[out_coords[sel, 0], c_in[sel, 0], c_in[sel, 1], c_in[sel, 2]]
        gidx[ki, sel] = vals
        has = vals >= 0
        ginv[ki, vals[has]] = sel[has]
    return out_coords, tuple(int(v) for v in out_shape), gidx, ginv


# --------------------------------------------------------------------------------------
# Parameters (deterministic synthetic init)
# --------------------------------------------------------------------------------------
def _make_conv_params(key, k_total, c_in, c_out):
    kw, kg, kb = jax.random.split(key, 3)
    w = 0.1 * jax.random.normal(kw, (k_total, c_in, c_out), jnp.float32)
    gamma = 1.0 + 0.1 * jax.random.normal(kg, (c_out,), jnp.float32)
    beta = 0.1 * jax.random.normal(kb, (c_out,), jnp.float32)
    eps = 1e-3
    # TODO(synk): BatchNorm1d is reproduced in eval mode (running_mean=0, running_var=1 fold);
    #             training-mode batch statistics are not computed.
    scale = gamma / jnp.sqrt(1.0 + eps)
    shift = beta
    return (w, scale, shift)


def make_params(key, input_channels):
    P = {}
    state = {"key": key}

    def nxt():
        state["key"], sub = jax.random.split(state["key"])
        return sub

    def conv(kt, ci, co):
        return _make_conv_params(nxt(), kt, ci, co)

    P["conv_input"] = conv(27, input_channels, 16)
    P["conv1"] = conv(27, 16, 16)
    P["conv2_0"] = conv(27, 16, 32)
    P["conv2_1"] = conv(27, 32, 32)
    P["conv2_2"] = conv(27, 32, 32)
    P["conv3_0"] = conv(27, 32, 64)
    P["conv3_1"] = conv(27, 64, 64)
    P["conv3_2"] = conv(27, 64, 64)
    P["conv4_0"] = conv(27, 64, 64)
    P["conv4_1"] = conv(27, 64, 64)
    P["conv4_2"] = conv(27, 64, 64)
    P["conv_out"] = conv(3, 64, 128)          # kernel (3,1,1)
    for lvl, c in ((4, 64), (3, 64), (2, 32), (1, 16)):
        P[f"t{lvl}_1"] = conv(27, c, c)
        P[f"t{lvl}_2"] = conv(27, c, c)
    P["m4"] = conv(27, 128, 64)
    P["inv4"] = conv(27, 64, 64)
    P["m3"] = conv(27, 128, 64)
    P["inv3"] = conv(27, 64, 32)
    P["m2"] = conv(27, 64, 32)
    P["inv2"] = conv(27, 32, 16)
    P["m1"] = conv(27, 32, 16)
    P["conv5"] = conv(27, 16, 16)
    return P


# --------------------------------------------------------------------------------------
# Forward pass (mirrors UNetV2.forward)
# --------------------------------------------------------------------------------------
def subm_block(feat, gidx, p, relu=True):
    w, s, b = p
    return sparse_conv_bn(feat, gidx, w, s, b, relu=relu)


def basic_block(feat, gidx, p1, p2):
    # SparseBasicBlock: conv+bn+relu, conv+bn, +identity, relu  (residual before the final ReLU)
    out = subm_block(feat, gidx, p1, relu=True)
    out = sparse_conv_bn(out, gidx, p2[0], p2[1], p2[2],
                         residual=feat, relu=True, res_after_relu=False)
    return out


def channel_reduction(feat, out_channels):
    n, c_in = feat.shape
    return feat.reshape(n, out_channels, c_in // out_channels).sum(axis=2)


def ur_block(lateral_feat, bottom_feat, gidx_lat, t_params, m_params, inv_params, inv_gidx):
    x_trans = basic_block(lateral_feat, gidx_lat, t_params[0], t_params[1])
    x_cat = jnp.concatenate([bottom_feat, x_trans], axis=1)
    c_out_m = m_params[0].shape[2]
    # channel-reduction add is fused into the m-conv epilogue (after its ReLU, as in the reference)
    x_red = channel_reduction(x_cat, c_out_m)
    x_sum = sparse_conv_bn(x_cat, gidx_lat, m_params[0], m_params[1], m_params[2],
                           residual=x_red, relu=True, res_after_relu=True)
    return subm_block(x_sum, inv_gidx, inv_params, relu=True)


def unetv2_forward(voxel_features, coords, batch_size, sparse_shape,
                   voxel_size, point_cloud_range, P):
    coords = np.asarray(coords)

    # --- rulebooks (host-side geometry, glue) ---
    g_subm1 = build_subm_rules(coords, sparse_shape, batch_size)
    coords2, shape2, g_sp2, ginv2 = build_spconv_rules(coords, sparse_shape, batch_size,
                                                       (3, 3, 3), (2, 2, 2), (1, 1, 1))
    g_subm2 = build_subm_rules(coords2, shape2, batch_size)
    coords3, shape3, g_sp3, ginv3 = build_spconv_rules(coords2, shape2, batch_size,
                                                       (3, 3, 3), (2, 2, 2), (1, 1, 1))
    g_subm3 = build_subm_rules(coords3, shape3, batch_size)
    coords4, shape4, g_sp4, ginv4 = build_spconv_rules(coords3, shape3, batch_size,
                                                       (3, 3, 3), (2, 2, 2), (0, 1, 1))
    g_subm4 = build_subm_rules(coords4, shape4, batch_size)
    coords_out, shape_out, g_spout, _ = build_spconv_rules(coords4, shape4, batch_size,
                                                           (3, 1, 1), (2, 1, 1), (0, 0, 0))

    feat = jnp.asarray(voxel_features, jnp.float32)

    # --- encoder ---
    x = subm_block(feat, g_subm1, P["conv_input"])
    x_conv1 = subm_block(x, g_subm1, P["conv1"])

    x = subm_block(x_conv1, g_sp2, P["conv2_0"])
    x = subm_block(x, g_subm2, P["conv2_1"])
    x_conv2 = subm_block(x, g_subm2, P["conv2_2"])

    x = subm_block(x_conv2, g_sp3, P["conv3_0"])
    x = subm_block(x, g_subm3, P["conv3_1"])
    x_conv3 = subm_block(x, g_subm3, P["conv3_2"])

    x = subm_block(x_conv3, g_sp4, P["conv4_0"])
    x = subm_block(x, g_subm4, P["conv4_1"])
    x_conv4 = subm_block(x, g_subm4, P["conv4_2"])

    encoded_features = subm_block(x_conv4, g_spout, P["conv_out"])  # encoded_spconv_tensor features

    # --- decoder (UR blocks) ---
    x_up4 = ur_block(x_conv4, x_conv4, g_subm4, (P["t4_1"], P["t4_2"]), P["m4"], P["inv4"], ginv4)
    x_up3 = ur_block(x_conv3, x_up4, g_subm3, (P["t3_1"], P["t3_2"]), P["m3"], P["inv3"], ginv3)
    x_up2 = ur_block(x_conv2, x_up3, g_subm2, (P["t2_1"], P["t2_2"]), P["m2"], P["inv2"], ginv2)
    x_up1 = ur_block(x_conv1, x_up2, g_subm1, (P["t1_1"], P["t1_2"]), P["m1"], P["conv5"], g_subm1)

    point_features = x_up1  # (N, 16)

    # point coords: batch idx + voxel centers (xyz)
    vsz = jnp.asarray(voxel_size, jnp.float32)
    pc_min = jnp.asarray(point_cloud_range[:3], jnp.float32)
    zyx = jnp.asarray(coords[:, 1:4], jnp.float32)
    centers = (zyx[:, ::-1] + 0.5) * vsz + pc_min
    point_coords = jnp.concatenate([jnp.asarray(coords[:, 0:1], jnp.float32), centers], axis=1)

    return point_features, point_coords, encoded_features, coords_out


# --------------------------------------------------------------------------------------
if __name__ == "__main__":
    key = jax.random.PRNGKey(0)
    batch_size = 2
    input_channels = 4
    grid_size = np.array([16, 16, 24])                     # [nx, ny, nz]
    voxel_size = np.array([0.1, 0.1, 0.1], np.float32)
    point_cloud_range = np.array([0., 0., 0., 1.6, 1.6, 2.4], np.float32)
    sparse_shape = tuple(int(v) for v in (grid_size[::-1] + np.array([1, 0, 0])))  # (25, 16, 16)

    k_occ, k_feat, k_param = jax.random.split(key, 3)

    # deterministic sparse occupancy -> voxel coords [b, z, y, x]
    occ = jax.random.uniform(k_occ, (batch_size,) + sparse_shape) < 0.02
    coords = np.argwhere(np.asarray(occ)).astype(np.int32)
    num_voxels = coords.shape[0]
    voxel_features = jax.random.normal(k_feat, (num_voxels, input_channels), jnp.float32)

    params = make_params(k_param, input_channels)

    point_features, point_coords, encoded_features, coords_enc = unetv2_forward(
        voxel_features, coords, batch_size, sparse_shape, voxel_size, point_cloud_range, params)

    jax.block_until_ready((point_features, point_coords, encoded_features))

    assert point_features.shape == (num_voxels, 16)
    assert point_coords.shape == (num_voxels, 4)
    assert encoded_features.shape[1] == 128
    print("KERNEL_OK")
</pallas_src>

<mosaic_0001>
module attributes {stable_mosaic.version = 11 : i64} {
  func.func @_conv_bn_kernel(%arg0: i32, %arg1: memref<384x108xbf16, #tpu.memory_space<vmem>>, %arg2: memref<108x16xbf16, #tpu.memory_space<vmem>>, %arg3: memref<1x16xf32, #tpu.memory_space<vmem>>, %arg4: memref<1x16xf32, #tpu.memory_space<vmem>>, %arg5: memref<384x16xf32, #tpu.memory_space<vmem>>) attributes {dimension_semantics = [#tpu.dimension_semantics<parallel>], iteration_bounds = array<i64: 1>, scalar_prefetch = 0 : i64, scratch_operands = 0 : i64, tpu.core_type = #tpu.core_type<tc>, window_params = [{transform_indices = @transform_0, window_bounds = array<i64: 384, 108>}, {pipeline_mode = #tpu.pipeline_mode<synchronous>, transform_indices = @transform_1, window_bounds = array<i64: 108, 16>}, {pipeline_mode = #tpu.pipeline_mode<synchronous>, transform_indices = @transform_2, window_bounds = array<i64: 1, 16>}, {pipeline_mode = #tpu.pipeline_mode<synchronous>, transform_indices = @transform_3, window_bounds = array<i64: 1, 16>}, {transform_indices = @transform_4, window_bounds = array<i64: 384, 16>}]} {
    %c0 = arith.constant 0 : index
    %c0_0 = arith.constant 0 : index
    %0 = vector.load %arg1[%c0, %c0_0] : memref<384x108xbf16, #tpu.memory_space<vmem>>, vector<384x108xbf16>
    %c0_1 = arith.constant 0 : index
    %c0_2 = arith.constant 0 : index
    %1 = vector.load %arg2[%c0_1, %c0_2] : memref<108x16xbf16, #tpu.memory_space<vmem>>, vector<108x16xbf16>
    %cst = arith.constant dense<0.000000e+00> : vector<384x16xf32>
    %2 = tpu.matmul %0, %1, %cst {dimension_numbers = #tpu.dot_dimension_numbers<[1], [0], [0], [1], [0, 0, 1, 1], [], []>} : vector<384x108xbf16>, vector<108x16xbf16>, vector<384x16xf32> -> vector<384x16xf32>
    %c0_3 = arith.constant 0 : index
    %c0_4 = arith.constant 0 : index
    %3 = vector.load %arg3[%c0_3, %c0_4] : memref<1x16xf32, #tpu.memory_space<vmem>>, vector<1x16xf32>
    %4 = vector.broadcast %3 : vector<1x16xf32> to vector<384x16xf32>
    %5 = arith.mulf %2, %4 : vector<384x16xf32>
    %c0_5 = arith.constant 0 : index
    %c0_6 = arith.constant 0 : index
    %6 = vector.load %arg4[%c0_5, %c0_6] : memref<1x16xf32, #tpu.memory_space<vmem>>, vector<1x16xf32>
    %7 = vector.broadcast %6 : vector<1x16xf32> to vector<384x16xf32>
    %8 = arith.addf %5, %7 : vector<384x16xf32>
    %cst_7 = arith.constant 0.000000e+00 : f32
    %9 = vector.broadcast %cst_7 : f32 to vector<384x16xf32>
    %10 = arith.maximumf %8, %9 : vector<384x16xf32>
    %c0_8 = arith.constant 0 : index
    %c0_9 = arith.constant 0 : index
    %11 = vector.load %arg5[%c0_8, %c0_9] : memref<384x16xf32, #tpu.memory_space<vmem>>, vector<384x16xf32>
    tpu.vector_store %arg5[%c0_8, %c0_9], %10 {strides = array<i32>} : memref<384x16xf32, #tpu.memory_space<vmem>>, vector<384x16xf32>,
    return
  }
  func.func @transform_0(%arg0: i32) -> (i32, i32) {
    %c0_i32 = arith.constant 0 : i32
    %c0_i32_0 = arith.constant 0 : i32
    return %arg0, %c0_i32 : i32, i32
  }
  func.func @transform_1(%arg0: i32) -> (i32, i32) {
    %c0_i32 = arith.constant 0 : i32
    %c0_i32_0 = arith.constant 0 : i32
    %c0_i32_1 = arith.constant 0 : i32
    return %c0_i32, %c0_i32_0 : i32, i32
  }
  func.func @transform_2(%arg0: i32) -> (i32, i32) {
    %c0_i32 = arith.constant 0 : i32
    %c0_i32_0 = arith.constant 0 : i32
    %c0_i32_1 = arith.constant 0 : i32
    return %c0_i32, %c0_i32_0 : i32, i32
  }
  func.func @transform_3(%arg0: i32) -> (i32, i32) {
    %c0_i32 = arith.constant 0 : i32
    %c0_i32_0 = arith.constant 0 : i32
    %c0_i32_1 = arith.constant 0 : i32
    return %c0_i32, %c0_i32_0 : i32, i32
  }
  func.func @transform_4(%arg0: i32) -> (i32, i32) {
    %c0_i32 = arith.constant 0 : i32
    %c0_i32_0 = arith.constant 0 : i32
    return %arg0, %c0_i32 : i32, i32
  }
}

</mosaic_0001>

<llo_original>
// kernel: tpu_custom_call.1
$region0: #{tpu_custom_call.1}
  #allocation0 [shape = 'u32[]', space=smem, size = 0x4, offset = 0x4, fixed_abs, tag = 'smem constant byte address 0x4 - core index']
  #allocation1 [shape = 'u32[72,128]{1,0:T(1,128)}', space=vmem, size = 0x9000, scoped, tag = 'internal scratch']
  %s0 = inlined_call_operand.vmem [shape: bf16[384,108], index: 0, kind: input, shape index: {}]
  %s1 = inlined_call_operand.vmem [shape: bf16[108,16], index: 1, kind: input, shape index: {}]
  %s2 = inlined_call_operand.vmem [shape: f32[1,16], index: 2, kind: input, shape index: {}]
  %s3 = inlined_call_operand.vmem [shape: f32[1,16], index: 3, kind: input, shape index: {}]
  %s4 = inlined_call_operand.vmem [shape: f32[384,16], index: 4, kind: output, shape index: {}]
  %s5 = sld [smem:[#allocation0]]
  $region26: #{tpu_custom_call.1} parent=0
    _
  %s7 = ssub.s32 1, %s5
  %s8 = scalar_select 0, %s7, %s5
  // Predicated region
  $region2: #{tpu_custom_call.1} parent=0 // pred_check
    _
  $region3: #{tpu_custom_call.1} parent=0 // pred_check_branch
    %10 = sbr.rel (0) target = $region5
  $region4: #{tpu_custom_call.1} parent=0 // pred_region
    _
  $region5: #{tpu_custom_call.1} parent=0 // pred_fallthru
    _
  // Predicated region
  $region6: #{tpu_custom_call.1} parent=0 // pred_check
    _
  $region7: #{tpu_custom_call.1} parent=0 // pred_check_branch
    %12 = sbr.rel (0) target = $region9
  $region8: #{tpu_custom_call.1} parent=0 // pred_region
    _
  $region9: #{tpu_custom_call.1} parent=0 // pred_fallthru
    _
  // Predicated region
  $region10: #{tpu_custom_call.1} parent=0 // pred_check
    _
  $region11: #{tpu_custom_call.1} parent=0 // pred_check_branch
    %14 = sbr.rel (0) target = $region13
  $region12: #{tpu_custom_call.1} parent=0 // pred_region
    _
  $region13: #{tpu_custom_call.1} parent=0 // pred_fallthru
    _
  // Predicated region
  $region14: #{tpu_custom_call.1} parent=0 // pred_check
    _
  $region15: #{tpu_custom_call.1} parent=0 // pred_check_branch
    %16 = sbr.rel (0) target = $region17
  $region16: #{tpu_custom_call.1} parent=0 // pred_region
    _
  $region17: #{tpu_custom_call.1} parent=0 // pred_fallthru
    _
  %v18 = vld [vmem:[%s0] sm:$0xf]
  %v19 = vld [vmem:[%s0 + $0x4] sm:$0xf]
  %v20 = vld [vmem:[%s0 + $0x8] sm:$0xf]
  %v21 = vld [vmem:[%s0 + $0xc] sm:$0xf]
  %v22 = vld [vmem:[%s0 + $0x10] sm:$0xf]
  %v23 = vld [vmem:[%s0 + $0x14] sm:$0xf]
  %v24 = vld [vmem:[%s0 + $0x18] sm:$0xf]
  %v25 = vld [vmem:[%s0 + $0x1c] sm:$0xf]
  %v26 = vld [vmem:[%s0 + $0x20] sm:$0xf]
  %v27 = vld [vmem:[%s0 + $0x24] sm:$0xf]
  %v28 = vld [vmem:[%s0 + $0x28] sm:$0xf]
  %v29 = vld [vmem:[%s0 + $0x2c] sm:$0xf]
  %v30 = vld [vmem:[%s0 + $0x30] sm:$0xf]
  %v31 = vld [vmem:[%s0 + $0x34] sm:$0xf]
  %v32 = vld [vmem:[%s0 + $0x38] sm:$0xf]
  %v33 = vld [vmem:[%s0 + $0x3c] sm:$0xf]
  %v34 = vld [vmem:[%s0 + $0x40] sm:$0xf]
  %v35 = vld [vmem:[%s0 + $0x44] sm:$0xf]
  %v36 = vld [vmem:[%s0 + $0x48] sm:$0xf]
  %v37 = vld [vmem:[%s0 + $0x4c] sm:$0xf]
  %v38 = vld [vmem:[%s0 + $0x50] sm:$0xf]
  %v39 = vld [vmem:[%s0 + $0x54] sm:$0xf]
  %v40 = vld [vmem:[%s0 + $0x58] sm:$0xf]
  %v41 = vld [vmem:[%s0 + $0x5c] sm:$0xf]
  %v42 = vld [vmem:[%s0 + $0x60] sm:$0xf]
  %v43 = vld [vmem:[%s0 + $0x64] sm:$0xf]
  %v44 = vld [vmem:[%s0 + $0x68] sm:$0xf]
  %v45 = vld [vmem:[%s0 + $0x6c] sm:$0xf]
  %v46 = vld [vmem:[%s0 + $0x70] sm:$0xf]
  %v47 = vld [vmem:[%s0 + $0x74] sm:$0xf]
  %v48 = vld [vmem:[%s0 + $0x78] sm:$0xf]
  %v49 = vld [vmem:[%s0 + $0x7c] sm:$0xf]
  %v50 = vld [vmem:[%s0 + $0x80] sm:$0xf]
  %v51 = vld [vmem:[%s0 + $0x84] sm:$0xf]
  %v52 = vld [vmem:[%s0 + $0x88] sm:$0xf]
  %v53 = vld [vmem:[%s0 + $0x8c] sm:$0xf]
  %v54 = vld [vmem:[%s0 + $0x90] sm:$0xf]
  %v55 = vld [vmem:[%s0 + $0x94] sm:$0xf]
  %v56 = vld [vmem:[%s0 + $0x98] sm:$0xf]
  %v57 = vld [vmem:[%s0 + $0x9c] sm:$0xf]
  %v58 = vld [vmem:[%s0 + $0xa0] sm:$0xf]
  %v59 = vld [vmem:[%s0 + $0xa4] sm:$0xf]
  %v60 = vld [vmem:[%s0 + $0xa8] sm:$0xf]
  %v61 = vld [vmem:[%s0 + $0xac] sm:$0xf]
  %v62 = vld [vmem:[%s0 + $0xb0] sm:$0xf]
  %v63 = vld [vmem:[%s0 + $0xb4] sm:$0xf]
  %v64 = vld [vmem:[%s0 + $0xb8] sm:$0xf]
  %v65 = vld [vmem:[%s0 + $0xbc] sm:$0xf]
  %v66 = vld [vmem:[%s1] sm:$0xf]
  %v67 = vld [vmem:[%s1 + $0x4] sm:$0xf]
  %v68 = vld [vmem:[%s1 + $0x8] sm:$0xf]
  %v69 = vld [vmem:[%s1 + $0xc] sm:$0xf]
  %v70 = vld [vmem:[%s1 + $0x10] sm:$0xf]
  %v71 = vld [vmem:[%s1 + $0x14] sm:$0xf]
  %v72 = vld [vmem:[%s1 + $0x18] sm:$0xf]
  %v73 = vld [vmem:[%s1 + $0x1c] sm:$0xf]
  %v74 = vld [vmem:[%s1 + $0x20] sm:$0xf]
  %v75 = vld [vmem:[%s1 + $0x24] sm:$0xf]
  %v76 = vld [vmem:[%s1 + $0x28] sm:$0xf]
  %v77 = vld [vmem:[%s1 + $0x2c] sm:$0xf]
  %v78 = vld [vmem:[%s1 + $0x30] sm:$0xf]
  %v79 = vld [vmem:[%s1 + $0x34] sm:$0x3]
  %v128 = vunpack.c.l.b16 %v18
  %v129 = vunpack.c.l.b16 %v19
  %v130 = vunpack.c.l.b16 %v20
  %v131 = vunpack.c.l.b16 %v21
  %v132 = vunpack.c.l.b16 %v22
  %v133 = vunpack.c.l.b16 %v23
  %v134 = vunpack.c.l.b16 %v24
  %v135 = vunpack.c.l.b16 %v25
  %v136 = vunpack.c.l.b16 %v26
  %v137 = vunpack.c.l.b16 %v27
  %v138 = vunpack.c.l.b16 %v28
  %v139 = vunpack.c.l.b16 %v29
  %v140 = vunpack.c.l.b16 %v30
  %v141 = vunpack.c.l.b16 %v31
  %v142 = vunpack.c.l.b16 %v32
  %v143 = vunpack.c.l.b16 %v33
  %v144 = vunpack.c.l.b16 %v34
  %v145 = vunpack.c.l.b16 %v35
  %v146 = vunpack.c.l.b16 %v36
  %v147 = vunpack.c.l.b16 %v37
  %v148 = vunpack.c.l.b16 %v38
  %v149 = vunpack.c.l.b16 %v39
  %v150 = vunpack.c.l.b16 %v40
  %v151 = vunpack.c.l.b16 %v41
  %v152 = vunpack.c.l.b16 %v42
  %v153 = vunpack.c.l.b16 %v43
  %v154 = vunpack.c.l.b16 %v44
  %v155 = vunpack.c.l.b16 %v45
  %v156 = vunpack.c.l.b16 %v46
  %v157 = vunpack.c.l.b16 %v47
  %v158 = vunpack.c.l.b16 %v48
  %v159 = vunpack.c.l.b16 %v49
  %v160 = vunpack.c.l.b16 %v50
  %v161 = vunpack.c.l.b16 %v51
  %v162 = vunpack.c.l.b16 %v52
  %v163 = vunpack.c.l.b16 %v53
  %v164 = vunpack.c.l.b16 %v54
  %v165 = vunpack.c.l.b16 %v55
  %v166 = vunpack.c.l.b16 %v56
  %v167 = vunpack.c.l.b16 %v57
  %v168 = vunpack.c.l.b16 %v58
  %v169 = vunpack.c.l.b16 %v59
  %v170 = vunpack.c.l.b16 %v60
  %v171 = vunpack.c.l.b16 %v61
  %v172 = vunpack.c.l.b16 %v62
  %v173 = vunpack.c.l.b16 %v63
  %v174 = vunpack.c.l.b16 %v64
  %v175 = vunpack.c.l.b16 %v65
  %v176 = vpack.c.b16 %v129, %v128
  %v177 = vpack.c.b16 %v131, %v130
  %v178 = vpack.c.b16 %v133, %v132
  %v179 = vpack.c.b16 %v135, %v134
  %v180 = vpack.c.b16 %v137, %v136
  %v181 = vpack.c.b16 %v139, %v138
  %v182 = vpack.c.b16 %v141, %v140
  %v183 = vpack.c.b16 %v143, %v142
  %v184 = vpack.c.b16 %v145, %v144
  %v185 = vpack.c.b16 %v147, %v146
  %v186 = vpack.c.b16 %v149, %v148
  %v187 = vpack.c.b16 %v151, %v150
  %v188 = vpack.c.b16 %v153, %v152
  %v189 = vpack.c.b16 %v155, %v154
  %v190 = vpack.c.b16 %v157, %v156
  %v191 = vpack.c.b16 %v159, %v158
  %v192 = vpack.c.b16 %v161, %v160
  %v193 = vpack.c.b16 %v163, %v162
  %v194 = vpack.c.b16 %v165, %v164
  %v195 = vpack.c.b16 %v167, %v166
  %v196 = vpack.c.b16 %v169, %v168
  %v197 = vpack.c.b16 %v171, %v170
  %v198 = vpack.c.b16 %v173, %v172
  %v199 = vpack.c.b16 %v175, %v174
  %v214 = vunpack.c.l.b16 %v66
  %v215 = vunpack.c.l.b16 %v67
  %v216 = vunpack.c.l.b16 %v68
  %v217 = vunpack.c.l.b16 %v69
  %v218 = vunpack.c.l.b16 %v70
  %v219 = vunpack.c.l.b16 %v71
  %v220 = vunpack.c.l.b16 %v72
  %v221 = vunpack.c.l.b16 %v73
  %v222 = vunpack.c.l.b16 %v74
  %v223 = vunpack.c.l.b16 %v75
  %v224 = vunpack.c.l.b16 %v76
  %v225 = vunpack.c.l.b16 %v77
  %v226 = vunpack.c.l.b16 %v78
  %v227 = vunpack.c.l.b16 %v79
  %v228 = vpack.c.b16 %v215, %v214
  %v229 = vpack.c.b16 %v217, %v216
  %v230 = vpack.c.b16 %v219, %v218
  %v231 = vpack.c.b16 %v221, %v220
  %v232 = vpack.c.b16 %v223, %v222
  %v233 = vpack.c.b16 %v225, %v224
  %v234 = vpack.c.b16 %v227, %v226
  %vm241 = vcmask 883712
  %v243 = vsel %vm241, %v176, 0
  %v246 = vsel %vm241, %v177, 0
  %v249 = vsel %vm241, %v178, 0
  %v252 = vsel %vm241, %v179, 0
  %v255 = vsel %vm241, %v180, 0
  %v258 = vsel %vm241, %v181, 0
  %v261 = vsel %vm241, %v182, 0
  %v264 = vsel %vm241, %v183, 0
  %v267 = vsel %vm241, %v184, 0
  %v270 = vsel %vm241, %v185, 0
  %v273 = vsel %vm241, %v186, 0
  %v276 = vsel %vm241, %v187, 0
  %v279 = vsel %vm241, %v188, 0
  %v282 = vsel %vm241, %v189, 0
  %v285 = vsel %vm241, %v190, 0
  %v288 = vsel %vm241, %v191, 0
  %v291 = vsel %vm241, %v192, 0
  %v294 = vsel %vm241, %v193, 0
  %v297 = vsel %vm241, %v194, 0
  %v300 = vsel %vm241, %v195, 0
  %v303 = vsel %vm241, %v196, 0
  %v306 = vsel %vm241, %v197, 0
  %v309 = vsel %vm241, %v198, 0
  %v312 = vsel %vm241, %v199, 0
  %vm314 = vcmask 1045504
  %v316 = vsel %vm314, %v234, 0
  %318 = vmatpush.bf16.msra.mxu0 0
  %319 = vmatpush.bf16.msra.mxu0 %v316
  %320 = vmatpush.bf16.msra.mxu0 %v233
  %321 = vmatpush.bf16.msra.mxu0 %v232
  %322 = vmatpush.bf16.msra.mxu0 %v231
  %323 = vmatpush.bf16.msra.mxu0 %v230
  %324 = vmatpush.bf16.msra.mxu0 %v229
  %325 = vmatpush.bf16.msra.mxu0 %v228
  %326 = vmatmul.bf16.gmra.mxu0 %v243
  %v327 = vpop.f32.mrf.mxu0
  %v328 = vadd.f32 0.0, %v327
  %v329 = vpop.f32.mrf.mxu0
  %v330 = vadd.f32 0.0, %v329
  %331 = vmatmul.bf16.gmra.mxu0 %v246
  %v332 = vpop.f32.mrf.mxu0
  %v333 = vadd.f32 0.0, %v332
  %v334 = vpop.f32.mrf.mxu0
  %v335 = vadd.f32 0.0, %v334
  %336 = vmatmul.bf16.gmra.mxu0 %v249
  %v337 = vpop.f32.mrf.mxu0
  %v338 = vadd.f32 0.0, %v337
  %v339 = vpop.f32.mrf.mxu0
  %v340 = vadd.f32 0.0, %v339
  %341 = vmatmul.bf16.gmra.mxu0 %v252
  %v342 = vpop.f32.mrf.mxu0
  %v343 = vadd.f32 0.0, %v342
  %v344 = vpop.f32.mrf.mxu0
  %v345 = vadd.f32 0.0, %v344
  %346 = vmatmul.bf16.gmra.mxu0 %v255
  %v347 = vpop.f32.mrf.mxu0
  %v348 = vadd.f32 0.0, %v347
  %v349 = vpop.f32.mrf.mxu0
  %v350 = vadd.f32 0.0, %v349
  %351 = vmatmul.bf16.gmra.mxu0 %v258
  %v352 = vpop.f32.mrf.mxu0
  %v353 = vadd.f32 0.0, %v352
  %v354 = vpop.f32.mrf.mxu0
  %v355 = vadd.f32 0.0, %v354
  %356 = vmatmul.bf16.gmra.mxu0 %v261
  %v357 = vpop.f32.mrf.mxu0
  %v358 = vadd.f32 0.0, %v357
  %v359 = vpop.f32.mrf.mxu0
  %v360 = vadd.f32 0.0, %v359
  %361 = vmatmul.bf16.gmra.mxu0 %v264
  %v362 = vpop.f32.mrf.mxu0
  %v363 = vadd.f32 0.0, %v362
  %v364 = vpop.f32.mrf.mxu0
  %v365 = vadd.f32 0.0, %v364
  %366 = vmatmul.bf16.gmra.mxu0 %v267
  %v367 = vpop.f32.mrf.mxu0
  %v368 = vadd.f32 0.0, %v367
  %v369 = vpop.f32.mrf.mxu0
  %v370 = vadd.f32 0.0, %v369
  %371 = vmatmul.bf16.gmra.mxu0 %v270
  %v372 = vpop.f32.mrf.mxu0
  %v373 = vadd.f32 0.0, %v372
  %v374 = vpop.f32.mrf.mxu0
  %v375 = vadd.f32 0.0, %v374
  %376 = vmatmul.bf16.gmra.mxu0 %v273
  %v377 = vpop.f32.mrf.mxu0
  %v378 = vadd.f32 0.0, %v377
  %v379 = vpop.f32.mrf.mxu0
  %v380 = vadd.f32 0.0, %v379
  %381 = vmatmul.bf16.gmra.mxu0 %v276
  %v382 = vpop.f32.mrf.mxu0
  %v383 = vadd.f32 0.0, %v382
  %v384 = vpop.f32.mrf.mxu0
  %v385 = vadd.f32 0.0, %v384
  %386 = vmatmul.bf16.gmra.mxu0 %v279
  %v387 = vpop.f32.mrf.mxu0
  %v388 = vadd.f32 0.0, %v387
  %v389 = vpop.f32.mrf.mxu0
  %v390 = vadd.f32 0.0, %v389
  %391 = vmatmul.bf16.gmra.mxu0 %v282
  %v392 = vpop.f32.mrf.mxu0
  %v393 = vadd.f32 0.0, %v392
  %v394 = vpop.f32.mrf.mxu0
  %v395 = vadd.f32 0.0, %v394
  %396 = vmatmul.bf16.gmra.mxu0 %v285
  %v397 = vpop.f32.mrf.mxu0
  %v398 = vadd.f32 0.0, %v397
  %v399 = vpop.f32.mrf.mxu0
  %v400 = vadd.f32 0.0, %v399
  %401 = vmatmul.bf16.gmra.mxu0 %v288
  %v402 = vpop.f32.mrf.mxu0
  %v403 = vadd.f32 0.0, %v402
  %v404 = vpop.f32.mrf.mxu0
  %v405 = vadd.f32 0.0, %v404
  %406 = vmatmul.bf16.gmra.mxu0 %v291
  %v407 = vpop.f32.mrf.mxu0
  %v408 = vadd.f32 0.0, %v407
  %v409 = vpop.f32.mrf.mxu0
  %v410 = vadd.f32 0.0, %v409
  %411 = vmatmul.bf16.gmra.mxu0 %v294
  %v412 = vpop.f32.mrf.mxu0
  %v413 = vadd.f32 0.0, %v412
  %v414 = vpop.f32.mrf.mxu0
  %v415 = vadd.f32 0.0, %v414
  %416 = vmatmul.bf16.gmra.mxu0 %v297
  %v417 = vpop.f32.mrf.mxu0
  %v418 = vadd.f32 0.0, %v417
  %v419 = vpop.f32.mrf.mxu0
  %v420 = vadd.f32 0.0, %v419
  %421 = vmatmul.bf16.gmra.mxu0 %v300
  %v422 = vpop.f32.mrf.mxu0
  %v423 = vadd.f32 0.0, %v422
  %v424 = vpop.f32.mrf.mxu0
  %v425 = vadd.f32 0.0, %v424
  %426 = vmatmul.bf16.gmra.mxu0 %v303
  %v427 = vpop.f32.mrf.mxu0
  %v428 = vadd.f32 0.0, %v427
  %v429 = vpop.f32.mrf.mxu0
  %v430 = vadd.f32 0.0, %v429
  %431 = vmatmul.bf16.gmra.mxu0 %v306
  %v432 = vpop.f32.mrf.mxu0
  %v433 = vadd.f32 0.0, %v432
  %v434 = vpop.f32.mrf.mxu0
  %v435 = vadd.f32 0.0, %v434
  %436 = vmatmul.bf16.gmra.mxu0 %v309
  %v437 = vpop.f32.mrf.mxu0
  %v438 = vadd.f32 0.0, %v437
  %v439 = vpop.f32.mrf.mxu0
  %v440 = vadd.f32 0.0, %v439
  %441 = vmatmul.bf16.gmra.mxu0 %v312
  %v442 = vpop.f32.mrf.mxu0
  %v443 = vadd.f32 0.0, %v442
  %v444 = vpop.f32.mrf.mxu0
  %v445 = vadd.f32 0.0, %v444
  %446 = vdwg.mxu0
  %v447 = vld [vmem:[%s2] sm:$0x1]
  %v449 = vperm.slane %v447, 0
  %v451 = vmul.f32 %v328, %v449
  %v452 = vmul.f32 %v330, %v449
  %v453 = vmul.f32 %v333, %v449
  %v454 = vmul.f32 %v335, %v449
  %v455 = vmul.f32 %v338, %v449
  %v456 = vmul.f32 %v340, %v449
  %v457 = vmul.f32 %v343, %v449
  %v458 = vmul.f32 %v345, %v449
  %v459 = vmul.f32 %v348, %v449
  %v460 = vmul.f32 %v350, %v449
  %v461 = vmul.f32 %v353, %v449
  %v462 = vmul.f32 %v355, %v449
  %v463 = vmul.f32 %v358, %v449
  %v464 = vmul.f32 %v360, %v449
  %v465 = vmul.f32 %v363, %v449
  %v466 = vmul.f32 %v365, %v449
  %v467 = vmul.f32 %v368, %v449
  %v468 = vmul.f32 %v370, %v449
  %v469 = vmul.f32 %v373, %v449
  %v470 = vmul.f32 %v375, %v449
  %v471 = vmul.f32 %v378, %v449
  %v472 = vmul.f32 %v380, %v449
  %v473 = vmul.f32 %v383, %v449
  %v474 = vmul.f32 %v385, %v449
  %v475 = vmul.f32 %v388, %v449
  %v476 = vmul.f32 %v390, %v449
  %v477 = vmul.f32 %v393, %v449
  %v478 = vmul.f32 %v395, %v449
  %v479 = vmul.f32 %v398, %v449
  %v480 = vmul.f32 %v400, %v449
  %v481 = vmul.f32 %v403, %v449
  %v482 = vmul.f32 %v405, %v449
  %v483 = vmul.f32 %v408, %v449
  %v484 = vmul.f32 %v410, %v449
  %v485 = vmul.f32 %v413, %v449
  %v486 = vmul.f32 %v415, %v449
  %v487 = vmul.f32 %v418, %v449
  %v488 = vmul.f32 %v420, %v449
  %v489 = vmul.f32 %v423, %v449
  %v490 = vmul.f32 %v425, %v449
  %v491 = vmul.f32 %v428, %v449
  %v492 = vmul.f32 %v430, %v449
  %v493 = vmul.f32 %v433, %v449
  %v494 = vmul.f32 %v435, %v449
  %v495 = vmul.f32 %v438, %v449
  %v496 = vmul.f32 %v440, %v449
  %v497 = vmul.f32 %v443, %v449
  %v498 = vmul.f32 %v445, %v449
  %v499 = vld [vmem:[%s3] sm:$0x1]
  %v501 = vperm.slane %v499, 0
  %v503 = vadd.f32 %v451, %v501
  %v504 = vadd.f32 %v452, %v501
  %v505 = vadd.f32 %v453, %v501
  %v506 = vadd.f32 %v454, %v501
  %v507 = vadd.f32 %v455, %v501
  %v508 = vadd.f32 %v456, %v501
  %v509 = vadd.f32 %v457, %v501
  %v510 = vadd.f32 %v458, %v501
  %v511 = vadd.f32 %v459, %v501
  %v512 = vadd.f32 %v460, %v501
  %v513 = vadd.f32 %v461, %v501
  %v514 = vadd.f32 %v462, %v501
  %v515 = vadd.f32 %v463, %v501
  %v516 = vadd.f32 %v464, %v501
  %v517 = vadd.f32 %v465, %v501
  %v518 = vadd.f32 %v466, %v501
  %v519 = vadd.f32 %v467, %v501
  %v520 = vadd.f32 %v468, %v501
  %v521 = vadd.f32 %v469, %v501
  %v522 = vadd.f32 %v470, %v501
  %v523 = vadd.f32 %v471, %v501
  %v524 = vadd.f32 %v472, %v501
  %v525 = vadd.f32 %v473, %v501
  %v526 = vadd.f32 %v474, %v501
  %v527 = vadd.f32 %v475, %v501
  %v528 = vadd.f32 %v476, %v501
  %v529 = vadd.f32 %v477, %v501
  %v530 = vadd.f32 %v478, %v501
  %v531 = vadd.f32 %v479, %v501
  %v532 = vadd.f32 %v480, %v501
  %v533 = vadd.f32 %v481, %v501
  %v534 = vadd.f32 %v482, %v501
  %v535 = vadd.f32 %v483, %v501
  %v536 = vadd.f32 %v484, %v501
  %v537 = vadd.f32 %v485, %v501
  %v538 = vadd.f32 %v486, %v501
  %v539 = vadd.f32 %v487, %v501
  %v540 = vadd.f32 %v488, %v501
  %v541 = vadd.f32 %v489, %v501
  %v542 = vadd.f32 %v490, %v501
  %v543 = vadd.f32 %v491, %v501
  %v544 = vadd.f32 %v492, %v501
  %v545 = vadd.f32 %v493, %v501
  %v546 = vadd.f32 %v494, %v501
  %v547 = vadd.f32 %v495, %v501
  %v548 = vadd.f32 %v496, %v501
  %v549 = vadd.f32 %v497, %v501
  %v550 = vadd.f32 %v498, %v501
  %v551 = vmax.f32 %v503, 0.0
  %v552 = vmax.f32 %v504, 0.0
  %v553 = vmax.f32 %v505, 0.0
  %v554 = vmax.f32 %v506, 0.0
  %v555 = vmax.f32 %v507, 0.0
  %v556 = vmax.f32 %v508, 0.0
  %v557 = vmax.f32 %v509, 0.0
  %v558 = vmax.f32 %v510, 0.0
  %v559 = vmax.f32 %v511, 0.0
  %v560 = vmax.f32 %v512, 0.0
  %v561 = vmax.f32 %v513, 0.0
  %v562 = vmax.f32 %v514, 0.0
  %v563 = vmax.f32 %v515, 0.0
  %v564 = vmax.f32 %v516, 0.0
  %v565 = vmax.f32 %v517, 0.0
  %v566 = vmax.f32 %v518, 0.0
  %v567 = vmax.f32 %v519, 0.0
  %v568 = vmax.f32 %v520, 0.0
  %v569 = vmax.f32 %v521, 0.0
  %v570 = vmax.f32 %v522, 0.0
  %v571 = vmax.f32 %v523, 0.0
  %v572 = vmax.f32 %v524, 0.0
  %v573 = vmax.f32 %v525, 0.0
  %v574 = vmax.f32 %v526, 0.0
  %v575 = vmax.f32 %v527, 0.0
  %v576 = vmax.f32 %v528, 0.0
  %v577 = vmax.f32 %v529, 0.0
  %v578 = vmax.f32 %v530, 0.0
  %v579 = vmax.f32 %v531, 0.0
  %v580 = vmax.f32 %v532, 0.0
  %v581 = vmax.f32 %v533, 0.0
  %v582 = vmax.f32 %v534, 0.0
  %v583 = vmax.f32 %v535, 0.0
  %v584 = vmax.f32 %v536, 0.0
  %v585 = vmax.f32 %v537, 0.0
  %v586 = vmax.f32 %v538, 0.0
  %v587 = vmax.f32 %v539, 0.0
  %v588 = vmax.f32 %v540, 0.0
  %v589 = vmax.f32 %v541, 0.0
  %v590 = vmax.f32 %v542, 0.0
  %v591 = vmax.f32 %v543, 0.0
  %v592 = vmax.f32 %v544, 0.0
  %v593 = vmax.f32 %v545, 0.0
  %v594 = vmax.f32 %v546, 0.0
  %v595 = vmax.f32 %v547, 0.0
  %v596 = vmax.f32 %v548, 0.0
  %v597 = vmax.f32 %v549, 0.0
  %v598 = vmax.f32 %v550, 0.0
  %vm599 = vcmask 130048
  %600 = vst.msk [vmem:[%s4] sm:$0xff] %vm599, %v551
  %601 = vst.msk [vmem:[%s4 + $0x8] sm:$0xff] %vm599, %v552
  %602 = vst.msk [vmem:[%s4 + $0x10] sm:$0xff] %vm599, %v553
  %603 = vst.msk [vmem:[%s4 + $0x18] sm:$0xff] %vm599, %v554
  %604 = vst.msk [vmem:[%s4 + $0x20] sm:$0xff] %vm599, %v555
  %605 = vst.msk [vmem:[%s4 + $0x28] sm:$0xff] %vm599, %v556
  %606 = vst.msk [vmem:[%s4 + $0x30] sm:$0xff] %vm599, %v557
  %607 = vst.msk [vmem:[%s4 + $0x38] sm:$0xff] %vm599, %v558
  %608 = vst.msk [vmem:[%s4 + $0x40] sm:$0xff] %vm599, %v559
  %609 = vst.msk [vmem:[%s4 + $0x48] sm:$0xff] %vm599, %v560
  %610 = vst.msk [vmem:[%s4 + $0x50] sm:$0xff] %vm599, %v561
  %611 = vst.msk [vmem:[%s4 + $0x58] sm:$0xff] %vm599, %v562
  %612 = vst.msk [vmem:[%s4 + $0x60] sm:$0xff] %vm599, %v563
  %613 = vst.msk [vmem:[%s4 + $0x68] sm:$0xff] %vm599, %v564
  %614 = vst.msk [vmem:[%s4 + $0x70] sm:$0xff] %vm599, %v565
  %615 = vst.msk [vmem:[%s4 + $0x78] sm:$0xff] %vm599, %v566
  %616 = vst.msk [vmem:[%s4 + $0x80] sm:$0xff] %vm599, %v567
  %617 = vst.msk [vmem:[%s4 + $0x88] sm:$0xff] %vm599, %v568
  %618 = vst.msk [vmem:[%s4 + $0x90] sm:$0xff] %vm599, %v569
  %619 = vst.msk [vmem:[%s4 + $0x98] sm:$0xff] %vm599, %v570
  %620 = vst.msk [vmem:[%s4 + $0xa0] sm:$0xff] %vm599, %v571
  %621 = vst.msk [vmem:[%s4 + $0xa8] sm:$0xff] %vm599, %v572
  %622 = vst.msk [vmem:[%s4 + $0xb0] sm:$0xff] %vm599, %v573
  %623 = vst.msk [vmem:[%s4 + $0xb8] sm:$0xff] %vm599, %v574
  %624 = vst.msk [vmem:[%s4 + $0xc0] sm:$0xff] %vm599, %v575
  %625 = vst.msk [vmem:[%s4 + $0xc8] sm:$0xff] %vm599, %v576
  %626 = vst.msk [vmem:[%s4 + $0xd0] sm:$0xff] %vm599, %v577
  %627 = vst.msk [vmem:[%s4 + $0xd8] sm:$0xff] %vm599, %v578
  %628 = vst.msk [vmem:[%s4 + $0xe0] sm:$0xff] %vm599, %v579
  %629 = vst.msk [vmem:[%s4 + $0xe8] sm:$0xff] %vm599, %v580
  %630 = vst.msk [vmem:[%s4 + $0xf0] sm:$0xff] %vm599, %v581
  %631 = vst.msk [vmem:[%s4 + $0xf8] sm:$0xff] %vm599, %v582
  %632 = vst.msk [vmem:[%s4 + $0x100] sm:$0xff] %vm599, %v583
  %633 = vst.msk [vmem:[%s4 + $0x108] sm:$0xff] %vm599, %v584
  %634 = vst.msk [vmem:[%s4 + $0x110] sm:$0xff] %vm599, %v585
  %635 = vst.msk [vmem:[%s4 + $0x118] sm:$0xff] %vm599, %v586
  %636 = vst.msk [vmem:[%s4 + $0x120] sm:$0xff] %vm599, %v587
  %637 = vst.msk [vmem:[%s4 + $0x128] sm:$0xff] %vm599, %v588
  %638 = vst.msk [vmem:[%s4 + $0x130] sm:$0xff] %vm599, %v589
  %639 = vst.msk [vmem:[%s4 + $0x138] sm:$0xff] %vm599, %v590
  %640 = vst.msk [vmem:[%s4 + $0x140] sm:$0xff] %vm599, %v591
  %641 = vst.msk [vmem:[%s4 + $0x148] sm:$0xff] %vm599, %v592
  %642 = vst.msk [vmem:[%s4 + $0x150] sm:$0xff] %vm599, %v593
  %643 = vst.msk [vmem:[%s4 + $0x158] sm:$0xff] %vm599, %v594
  %644 = vst.msk [vmem:[%s4 + $0x160] sm:$0xff] %vm599, %v595
  %645 = vst.msk [vmem:[%s4 + $0x168] sm:$0xff] %vm599, %v596
  %646 = vst.msk [vmem:[%s4 + $0x170] sm:$0xff] %vm599, %v597
  %647 = vst.msk [vmem:[%s4 + $0x178] sm:$0xff] %vm599, %v598
  // Predicated region
  $region18: #{tpu_custom_call.1} parent=0 // pred_check
    _
  $region19: #{tpu_custom_call.1} parent=0 // pred_check_branch
    %649 = sbr.rel (0) target = $region21
  $region20: #{tpu_custom_call.1} parent=0 // pred_region
    _
  $region21: #{tpu_custom_call.1} parent=0 // pred_fallthru
    _
  // Predicated region
  $region22: #{tpu_custom_call.1} parent=0 // pred_check
    _
  $region23: #{tpu_custom_call.1} parent=0 // pred_check_branch
    %651 = sbr.rel (0) target = $region25
  $region24: #{tpu_custom_call.1} parent=0 // pred_region
    _
  $region25: #{tpu_custom_call.1} parent=0 // pred_fallthru
    _

</llo_original>
